<compile_context>
chip_gen: v7x
topology: tpu7x:2x2x1
jax: 0.10.0
libtpu: 0.0.40
codegen_flags: <defaults>
</compile_context>

<pallas_src>
import functools

import jax
import jax.numpy as jnp
from jax.experimental import pallas as pl
from jax.experimental.pallas import tpu as pltpu


# ---------------------------------------------------------------------------
# Kernels
# ---------------------------------------------------------------------------


def _streaming_kernel(x_ref, w_in_ref, b_in_ref, w_out_ref, b_out_ref, o_ref,
                      acc_ref):
    """Small-M path. Grid = (M tiles, N tiles, hidden chunks).

    Per step:
        h_c   = SiLU(x @ W_in[:, k-chunk] + b_in[k-chunk])     [tm, kc] f32
        acc  += h_c(bf16) @ W_out[k-chunk, n-tile]              [tm, tn] f32
    Weight chunks are double-buffered by the Pallas pipeline, so their HBM DMA
    is hidden behind the previous chunk's matmuls (the realistic MLPEmbedder
    call has M = batch and is weight-bandwidth bound).
    """
    k = pl.program_id(2)

    @pl.when(k == 0)
    def _init():
        acc_ref[...] = jnp.zeros_like(acc_ref)

    h = jnp.dot(x_ref[...], w_in_ref[...], preferred_element_type=jnp.float32)
    h = h + b_in_ref[...]
    # SiLU: h * sigmoid(h); exp + approx reciprocal both go to the EUP slot.
    h = h * pl.reciprocal(1.0 + jnp.exp(-h), approx=True)
    acc_ref[...] += jnp.dot(h.astype(w_out_ref.dtype), w_out_ref[...],
                            preferred_element_type=jnp.float32)

    @pl.when(k == pl.num_programs(2) - 1)
    def _finalize():
        o_ref[...] = (acc_ref[...] + b_out_ref[...]).astype(o_ref.dtype)


def _resident_kernel(x_ref, w_in_ref, b_in_ref, w_out_ref, b_out_ref, o_ref,
                     acc_ref, *, kc, n_chunks):
    """Large-M path: weights resident in VMEM, hidden chunked inside the body
    so the full [tm, hidden] f32 intermediate never exists; the unrolled chunk
    loop (single basic block) lets the LLO scheduler overlap the EUP SiLU of
    chunk i with the MXU accumulation of chunk i-1."""
    acc_ref[...] = jnp.zeros_like(acc_ref)
    for c in range(n_chunks):                       # fully static slices
        sl = slice(c * kc, (c + 1) * kc)
        h = jnp.dot(x_ref[...], w_in_ref[:, sl],
                    preferred_element_type=jnp.float32)
        h = h + b_in_ref[:, sl]
        h = h * pl.reciprocal(1.0 + jnp.exp(-h), approx=True)
        acc_ref[...] += jnp.dot(h.astype(w_out_ref.dtype), w_out_ref[sl, :],
                                preferred_element_type=jnp.float32)
    o_ref[...] = (acc_ref[...] + b_out_ref[...]).astype(o_ref.dtype)


# ---------------------------------------------------------------------------
# Wrapper
# ---------------------------------------------------------------------------


def _round_up(x, m):
    return ((x + m - 1) // m) * m


def _pick_chunk(hidden):
    for c in (512, 256, 128):
        if hidden % c == 0:
            return c
    return hidden


def _vmem_capacity_bytes():
    try:
        return int(pltpu.get_tpu_info().vmem_capacity_bytes)
    except Exception:
        return 64 << 20          # conservative: v7x per-TensorCore VMEM


def _weight_spec(shape, index_map, single_buffer):
    if single_buffer:
        try:
            # Constant index_map => double buffering buys nothing; keep 1 copy.
            return pl.BlockSpec(shape, index_map, pipeline_mode=pl.Buffered(1))
        except Exception:
            pass
    return pl.BlockSpec(shape, index_map)


def mlp_embedder(x, w_in, b_in, w_out, b_out, *, tm=256,
                 compute_dtype=jnp.bfloat16, out_dtype=None):
    """out = SiLU(x @ w_in + b_in) @ w_out + b_out.

    x:     [..., in_dim]
    w_in:  [in_dim, hidden]   (PyTorch in_layer.weight, pre-transposed)
    b_in:  [hidden]
    w_out: [hidden, hidden]   (PyTorch out_layer.weight, pre-transposed)
    b_out: [hidden]

    For the hot path, pass w_in / w_out already in `compute_dtype` (bf16); the
    wrapper only casts when dtypes differ.  Matmuls run on the MXU in bf16
    with f32 accumulation; biases and SiLU stay in f32.
    """
    *lead, in_dim = x.shape
    hidden = w_in.shape[1]
    assert w_in.shape == (in_dim, hidden)
    assert w_out.shape == (hidden, hidden)
    assert b_in.shape[-1] == hidden and b_out.shape[-1] == hidden
    out_dtype = x.dtype if out_dtype is None else out_dtype

    M = 1
    for d in lead:
        M *= d
    x2 = x.reshape(M, in_dim)

    # --- dtype plumbing (no-ops when inputs already match compute_dtype) ----
    xc = x2 if x2.dtype == compute_dtype else x2.astype(compute_dtype)
    w_in_c = w_in if w_in.dtype == compute_dtype else w_in.astype(compute_dtype)
    w_out_c = w_out if w_out.dtype == compute_dtype else w_out.astype(compute_dtype)
    b_in2 = b_in.reshape(1, hidden).astype(jnp.float32)
    b_out2 = b_out.reshape(1, hidden).astype(jnp.float32)

    # --- row tiling: pad M up to the tile; never shrink the tile below 8 ----
    M_pad = _round_up(max(M, 8), 8)
    tm_eff = max(8, (min(tm, M_pad) // 8) * 8)
    M_pad = _round_up(M_pad, tm_eff)
    if M_pad != M:
        xc = jnp.pad(xc, ((0, M_pad - M), (0, 0)))
    n_m = M_pad // tm_eff

    kc = _pick_chunk(hidden)          # hidden-chunk size (multiple of 128 or full)
    n_k = hidden // kc

    itemsize = jnp.dtype(compute_dtype).itemsize
    out_itemsize = jnp.dtype(out_dtype).itemsize
    vmem_cap = _vmem_capacity_bytes()
    weight_bytes = (in_dim * hidden + hidden * hidden) * itemsize

    # Small-M (realistic MLPEmbedder: M = batch): stream weight chunks.
    use_streaming = n_m <= 2

    if use_streaming and n_m < 2 and hidden % 256 == 0:
        tn = hidden // 2              # give v7x's second TensorCore work
    else:
        tn = hidden
    n_n = hidden // tn

    # Advisory cost estimate for the XLA scheduler.
    flops = 2 * M_pad * hidden * (in_dim * n_n + hidden)
    transcendentals = M_pad * hidden * n_n
    bytes_accessed = (M_pad * in_dim * itemsize
                      + weight_bytes * (n_m if use_streaming else 1)
                      + 2 * hidden * 4
                      + M_pad * hidden * out_itemsize)
    cost = pl.CostEstimate(flops=flops, transcendentals=transcendentals,
                           bytes_accessed=bytes_accessed)

    if use_streaming:
        grid = (n_m, n_n, n_k)
        in_specs = [
            pl.BlockSpec((tm_eff, in_dim), lambda i, j, k: (i, 0)),   # x tile
            pl.BlockSpec((in_dim, kc), lambda i, j, k: (0, k)),       # W_in chunk
            pl.BlockSpec((1, kc), lambda i, j, k: (0, k)),            # b_in chunk
            pl.BlockSpec((kc, tn), lambda i, j, k: (k, j)),           # W_out chunk
            pl.BlockSpec((1, tn), lambda i, j, k: (0, j)),            # b_out tile
        ]
        out_specs = pl.BlockSpec((tm_eff, tn), lambda i, j, k: (i, j))
        scratch_shapes = [pltpu.VMEM((tm_eff, tn), jnp.float32)]
        dim_sem = ("parallel", "parallel", "arbitrary")
        kernel = _streaming_kernel
        working_set = (2 * tm_eff * in_dim * itemsize
                       + 2 * in_dim * kc * itemsize + 2 * kc * 4
                       + 2 * kc * tn * itemsize + 2 * tn * 4
                       + 2 * tm_eff * tn * out_itemsize
                       + tm_eff * tn * 4) + (4 << 20)
    else:
        single_buffer = weight_bytes > (4 << 20)
        grid = (n_m,)
        in_specs = [
            pl.BlockSpec((tm_eff, in_dim), lambda i: (i, 0)),                 # x (streams)
            _weight_spec((in_dim, hidden), lambda i: (0, 0), single_buffer),  # W_in
            _weight_spec((1, hidden), lambda i: (0, 0), single_buffer),       # b_in
            _weight_spec((hidden, hidden), lambda i: (0, 0), single_buffer),  # W_out
            _weight_spec((1, hidden), lambda i: (0, 0), single_buffer),       # b_out
        ]
        out_specs = pl.BlockSpec((tm_eff, hidden), lambda i: (i, 0))
        scratch_shapes = [pltpu.VMEM((tm_eff, hidden), jnp.float32)]
        dim_sem = ("parallel",)
        kernel = functools.partial(_resident_kernel, kc=kc, n_chunks=n_k)
        wbuf = 1 if single_buffer else 2
        working_set = (wbuf * (weight_bytes + 2 * hidden * 4)
                       + 2 * tm_eff * in_dim * itemsize
                       + 2 * tm_eff * hidden * out_itemsize
                       + tm_eff * hidden * 4
                       + 2 * tm_eff * kc * 4) + (4 << 20)

    # Generation-aware VMEM budget: never request more than physical - headroom.
    vmem_limit = int(min(max(working_set, 32 << 20), vmem_cap - (8 << 20)))
    vmem_limit = max(vmem_limit, 16 << 20)

    out2 = pl.pallas_call(
        kernel,
        out_shape=jax.ShapeDtypeStruct((M_pad, hidden), out_dtype),
        grid_spec=pltpu.PrefetchScalarGridSpec(
            num_scalar_prefetch=0,
            grid=grid,
            in_specs=in_specs,
            out_specs=out_specs,
            scratch_shapes=scratch_shapes,
        ),
        compiler_params=pltpu.CompilerParams(
            dimension_semantics=dim_sem,
            vmem_limit_bytes=vmem_limit),
        cost_estimate=cost,
    )(xc, w_in_c, b_in2, w_out_c, b_out2)

    if M_pad != M:
        out2 = out2[:M]
    return out2.reshape(*lead, hidden)


# ---------------------------------------------------------------------------
# Self-test
# ---------------------------------------------------------------------------


if __name__ == "__main__":
    key = jax.random.PRNGKey(0)

    def make_params(k, in_dim, hidden, scale=0.05):
        kwi, kbi, kwo, kbo = jax.random.split(k, 4)
        w_in = jax.random.normal(kwi, (in_dim, hidden), jnp.float32) * scale
        b_in = jax.random.normal(kbi, (hidden,), jnp.float32) * scale
        w_out = jax.random.normal(kwo, (hidden, hidden), jnp.float32) * scale
        b_out = jax.random.normal(kbo, (hidden,), jnp.float32) * scale
        # Store matmul weights in bf16 ONCE, outside the hot path (perf #5).
        return (w_in.astype(jnp.bfloat16), b_in,
                w_out.astype(jnp.bfloat16), b_out, w_in, w_out)

    def reference(x, w_in_b, b_in, w_out_b, b_out):
        # Same bf16-compute / f32-accumulate recipe as the kernel.
        in_dim = x.shape[-1]
        hidden = w_in_b.shape[1]
        xr = x.reshape(-1, in_dim).astype(jnp.bfloat16)
        h = jnp.dot(xr, w_in_b, preferred_element_type=jnp.float32) + b_in
        h = h * jax.nn.sigmoid(h)
        o = jnp.dot(h.astype(jnp.bfloat16), w_out_b,
                    preferred_element_type=jnp.float32) + b_out
        return o.reshape(x.shape[:-1] + (hidden,))

    def check(x, params, label):
        w_in_b, b_in, w_out_b, b_out, w_in_f, w_out_f = params
        out = mlp_embedder(x, w_in_b, b_in, w_out_b, b_out)
        jax.block_until_ready(out)
        ref = reference(x, w_in_b, b_in, w_out_b, b_out)
        assert out.shape == ref.shape, (label, out.shape, ref.shape)
        assert jnp.allclose(out, ref, atol=1e-2, rtol=1e-2), (
            f"{label}: mismatch vs bf16 reference")
        # Looser sanity check against a pure-f32 reference.
        h32 = x.reshape(-1, x.shape[-1]) @ w_in_f + b_in
        h32 = h32 * jax.nn.sigmoid(h32)
        ref32 = (h32 @ w_out_f + b_out).reshape(ref.shape)
        assert jnp.allclose(out, ref32, atol=5e-2, rtol=5e-2), (
            f"{label}: mismatch vs f32 reference")

    k1, k2, k3, kx1, kx2, kx3 = jax.random.split(key, 6)

    # 1) Small shapes consistent with the module: batch=2, seq=8, in_dim=32,
    #    hidden=64 -> single row tile, streaming path (n_k = n_n = 1).
    p1 = make_params(k1, in_dim=32, hidden=64)
    x1 = jax.random.normal(kx1, (2, 8, 32), jnp.float32)
    check(x1, p1, "small / streaming")

    # 2) Realistic MLPEmbedder regime (M = batch, wider hidden): streaming
    #    path with hidden chunking (n_k > 1) and an N split for megacore.
    p2 = make_params(k2, in_dim=64, hidden=1024, scale=0.02)
    x2 = jax.random.normal(kx2, (3, 64), jnp.float32)
    check(x2, p2, "small-M / chunked streaming")

    # 3) Many rows, M not a multiple of 8 -> resident-weight path with
    #    in-kernel hidden chunking and row padding.
    p3 = make_params(k3, in_dim=32, hidden=64)
    x3 = jax.random.normal(kx3, (773, 32), jnp.float32)
    check(x3, p3, "large-M / resident")

    print("KERNEL_OK")
</pallas_src>

<mosaic_0001>
module attributes {stable_mosaic.version = 11 : i64} {
  func.func @_streaming_kernel(%arg0: i32, %arg1: i32, %arg2: i32, %arg3: memref<16x32xbf16, #tpu.memory_space<vmem>>, %arg4: memref<32x64xbf16, #tpu.memory_space<vmem>>, %arg5: memref<1x64xf32, #tpu.memory_space<vmem>>, %arg6: memref<64x64xbf16, #tpu.memory_space<vmem>>, %arg7: memref<1x64xf32, #tpu.memory_space<vmem>>, %arg8: memref<16x64xf32, #tpu.memory_space<vmem>>, %arg9: memref<16x64xf32, #tpu.memory_space<vmem>>) attributes {dimension_semantics = [#tpu.dimension_semantics<parallel>, #tpu.dimension_semantics<parallel>, #tpu.dimension_semantics<arbitrary>], iteration_bounds = array<i64: 1, 1, 1>, scalar_prefetch = 0 : i64, scratch_operands = 1 : i64, tpu.core_type = #tpu.core_type<tc>, window_params = [{transform_indices = @transform_0, window_bounds = array<i64: 16, 32>}, {transform_indices = @transform_1, window_bounds = array<i64: 32, 64>}, {transform_indices = @transform_2, window_bounds = array<i64: 1, 64>}, {transform_indices = @transform_3, window_bounds = array<i64: 64, 64>}, {transform_indices = @transform_4, window_bounds = array<i64: 1, 64>}, {transform_indices = @transform_5, window_bounds = array<i64: 16, 64>}]} {
    %c0_i32 = arith.constant 0 : i32
    %0 = arith.cmpi eq, %arg2, %c0_i32 : i32
    %1 = arith.extui %0 : i1 to i32
    %c0_i32_0 = arith.constant 0 : i32
    %2 = arith.cmpi ne, %1, %c0_i32_0 : i32
    scf.if %2 {
      %cst_17 = arith.constant 0.000000e+00 : f32
      %25 = vector.broadcast %cst_17 : f32 to vector<16x64xf32>
      %c0_18 = arith.constant 0 : index
      %c0_19 = arith.constant 0 : index
      %26 = vector.load %arg9[%c0_18, %c0_19] : memref<16x64xf32, #tpu.memory_space<vmem>>, vector<16x64xf32>
      tpu.vector_store %arg9[%c0_18, %c0_19], %25 {strides = array<i32>} : memref<16x64xf32, #tpu.memory_space<vmem>>, vector<16x64xf32>,
    } else {
    }
    %c0 = arith.constant 0 : index
    %c0_1 = arith.constant 0 : index
    %3 = vector.load %arg3[%c0, %c0_1] : memref<16x32xbf16, #tpu.memory_space<vmem>>, vector<16x32xbf16>
    %c0_2 = arith.constant 0 : index
    %c0_3 = arith.constant 0 : index
    %4 = vector.load %arg4[%c0_2, %c0_3] : memref<32x64xbf16, #tpu.memory_space<vmem>>, vector<32x64xbf16>
    %cst = arith.constant dense<0.000000e+00> : vector<16x64xf32>
    %5 = tpu.matmul %3, %4, %cst {dimension_numbers = #tpu.dot_dimension_numbers<[1], [0], [0], [1], [0, 0, 1, 1], [], []>} : vector<16x32xbf16>, vector<32x64xbf16>, vector<16x64xf32> -> vector<16x64xf32>
    %c0_4 = arith.constant 0 : index
    %c0_5 = arith.constant 0 : index
    %6 = vector.load %arg5[%c0_4, %c0_5] : memref<1x64xf32, #tpu.memory_space<vmem>>, vector<1x64xf32>
    %7 = vector.broadcast %6 : vector<1x64xf32> to vector<16x64xf32>
    %8 = arith.addf %5, %7 : vector<16x64xf32>
    %cst_6 = arith.constant 0.000000e+00 : f32
    %9 = vector.broadcast %cst_6 : f32 to vector<16x64xf32>
    %10 = arith.subf %9, %8 : vector<16x64xf32>
    %11 = math.exp %10 : vector<16x64xf32>
    %cst_7 = arith.constant 1.000000e+00 : f32
    %12 = vector.broadcast %cst_7 : f32 to vector<16x64xf32>
    %13 = arith.addf %12, %11 : vector<16x64xf32>
    %14 = tpu.reciprocal %13 {approx = true} : vector<16x64xf32> -> vector<16x64xf32>
    %15 = arith.mulf %8, %14 : vector<16x64xf32>
    %c0_8 = arith.constant 0 : index
    %c0_9 = arith.constant 0 : index
    %16 = vector.load %arg9[%c0_8, %c0_9] : memref<16x64xf32, #tpu.memory_space<vmem>>, vector<16x64xf32>
    %17 = arith.truncf %15 : vector<16x64xf32> to vector<16x64xbf16>
    %c0_10 = arith.constant 0 : index
    %c0_11 = arith.constant 0 : index
    %18 = vector.load %arg6[%c0_10, %c0_11] : memref<64x64xbf16, #tpu.memory_space<vmem>>, vector<64x64xbf16>
    %cst_12 = arith.constant dense<0.000000e+00> : vector<16x64xf32>
    %19 = tpu.matmul %17, %18, %cst_12 {dimension_numbers = #tpu.dot_dimension_numbers<[1], [0], [0], [1], [0, 0, 1, 1], [], []>} : vector<16x64xbf16>, vector<64x64xbf16>, vector<16x64xf32> -> vector<16x64xf32>
    %20 = arith.addf %16, %19 : vector<16x64xf32>
    %c0_13 = arith.constant 0 : index
    %c0_14 = arith.constant 0 : index
    %21 = vector.load %arg9[%c0_13, %c0_14] : memref<16x64xf32, #tpu.memory_space<vmem>>, vector<16x64xf32>
    tpu.vector_store %arg9[%c0_13, %c0_14], %20 {strides = array<i32>} : memref<16x64xf32, #tpu.memory_space<vmem>>, vector<16x64xf32>,
    %c0_i32_15 = arith.constant 0 : i32
    %22 = arith.cmpi eq, %arg2, %c0_i32_15 : i32
    %23 = arith.extui %22 : i1 to i32
    %c0_i32_16 = arith.constant 0 : i32
    %24 = arith.cmpi ne, %23, %c0_i32_16 : i32
    scf.if %24 {
      %c0_17 = arith.constant 0 : index
      %c0_18 = arith.constant 0 : index
      %25 = vector.load %arg9[%c0_17, %c0_18] : memref<16x64xf32, #tpu.memory_space<vmem>>, vector<16x64xf32>
      %c0_19 = arith.constant 0 : index
      %c0_20 = arith.constant 0 : index
      %26 = vector.load %arg7[%c0_19, %c0_20] : memref<1x64xf32, #tpu.memory_space<vmem>>, vector<1x64xf32>
      %27 = vector.broadcast %26 : vector<1x64xf32> to vector<16x64xf32>
      %28 = arith.addf %25, %27 : vector<16x64xf32>
      %c0_21 = arith.constant 0 : index
      %c0_22 = arith.constant 0 : index
      %29 = vector.load %arg8[%c0_21, %c0_22] : memref<16x64xf32, #tpu.memory_space<vmem>>, vector<16x64xf32>
      tpu.vector_store %arg8[%c0_21, %c0_22], %28 {strides = array<i32>} : memref<16x64xf32, #tpu.memory_space<vmem>>, vector<16x64xf32>,
    } else {
    }
    return
  }
  func.func @transform_0(%arg0: i32, %arg1: i32, %arg2: i32) -> (i32, i32) {
    %c0_i32 = arith.constant 0 : i32
    %c0_i32_0 = arith.constant 0 : i32
    return %arg0, %c0_i32 : i32, i32
  }
  func.func @transform_1(%arg0: i32, %arg1: i32, %arg2: i32) -> (i32, i32) {
    %c0_i32 = arith.constant 0 : i32
    %c0_i32_0 = arith.constant 0 : i32
    return %c0_i32, %arg2 : i32, i32
  }
  func.func @transform_2(%arg0: i32, %arg1: i32, %arg2: i32) -> (i32, i32) {
    %c0_i32 = arith.constant 0 : i32
    %c0_i32_0 = arith.constant 0 : i32
    return %c0_i32, %arg2 : i32, i32
  }
  func.func @transform_3(%arg0: i32, %arg1: i32, %arg2: i32) -> (i32, i32) {
    %c0_i32 = arith.constant 0 : i32
    return %arg2, %arg1 : i32, i32
  }
  func.func @transform_4(%arg0: i32, %arg1: i32, %arg2: i32) -> (i32, i32) {
    %c0_i32 = arith.constant 0 : i32
    %c0_i32_0 = arith.constant 0 : i32
    return %c0_i32, %arg1 : i32, i32
  }
  func.func @transform_5(%arg0: i32, %arg1: i32, %arg2: i32) -> (i32, i32) {
    %c0_i32 = arith.constant 0 : i32
    return %arg0, %arg1 : i32, i32
  }
}

</mosaic_0001>

<llo_original>
// kernel: tpu_custom_call.1
$region0: #{tpu_custom_call.1}
  #allocation0 [shape = 'u32[]', space=smem, size = 0x4, offset = 0x4, fixed_abs, tag = 'smem constant byte address 0x4 - core index']
  #allocation1 [shape = 'u32[144,128]{1,0:T(1,128)}', space=vmem, size = 0x12000, scoped, tag = 'internal scratch']
  #allocation2 [shape = 'f32[16,64]{1,0:T(8,128)}', space=vmem, size = 0x2000, scoped, tag = 'scratch operand']
  %s0 = inlined_call_operand.hbm [shape: bf16[16,32], index: 0, kind: input, shape index: {}]
  %s1 = inlined_call_operand.hbm [shape: bf16[32,64], index: 1, kind: input, shape index: {}]
  %s2 = inlined_call_operand.vmem [shape: f32[1,64], index: 2, kind: input, shape index: {}]
  %s3 = inlined_call_operand.hbm [shape: bf16[64,64], index: 3, kind: input, shape index: {}]
  %s4 = inlined_call_operand.vmem [shape: f32[1,64], index: 4, kind: input, shape index: {}]
  %s5 = inlined_call_operand.hbm [shape: f32[16,64], index: 5, kind: output, shape index: {}]
  %s6 = sld [smem:[#allocation0]]
  $region50: #{tpu_custom_call.1} parent=0
    _
  %s8 = ssub.s32 1, %s6
  %s9 = scalar_select 0, %s8, %s6
  $region1: #{tpu_custom_call.1} parent=0
    #allocation3 [shape = 'u8[4096]{0}', space=vmem, size = 0x1000, scoped, tag = 'input window, operand 0, single buffered']
    #allocation4 [shape = 's32[1]{0}', space=sflag, size = 0x4, scoped, tag = 'scoped memory for tpu_custom_call.1']
    #allocation5 [shape = 's32[1]{0}', space=sflag, size = 0x4, scoped, tag = 'scoped memory for tpu_custom_call.1']
    #allocation6 [shape = 'u8[8192]{0}', space=vmem, size = 0x2000, scoped, tag = 'input window, operand 1, single buffered']
    #allocation7 [shape = 's32[1]{0}', space=sflag, size = 0x4, scoped, tag = 'scoped memory for tpu_custom_call.1']
    #allocation8 [shape = 'u8[16384]{0}', space=vmem, size = 0x4000, scoped, tag = 'input window, operand 3, single buffered']
    #allocation9 [shape = 'u8[8192]{0}', space=vmem, size = 0x2000, scoped, tag = 'output window, operand 0, single buffered']
    %10 = vsyncpa [#allocation4], 0
    %11 = vsyncpa [#allocation7], 0
    %12 = vsyncpa [#allocation5], 0
    // Predicated region
    $region2: #{tpu_custom_call.1} parent=1 // pred_check
      _
    $region3: #{tpu_custom_call.1} parent=1 // pred_check_branch
      %14 = sbr.rel (0) target = $region5
    $region4: #{tpu_custom_call.1} parent=1 // pred_region
      %s16 = ssub.s32 128, 128
      %17 = vsyncadd [#allocation4], %s16
      %s18 = sshll.u32 [#allocation3], 4
      %s19 = int_to_ptr.vmem [resolvable:$true] %s18
      %24 = dma.hbm_to_vmem [thread:$0]  %s0, 128, %s19, [#allocation4], 64, 64, 4
    $region5: #{tpu_custom_call.1} parent=1 // pred_fallthru
      _
    // Predicated region
    $region6: #{tpu_custom_call.1} parent=1 // pred_check
      _
    $region7: #{tpu_custom_call.1} parent=1 // pred_check_branch
      %26 = sbr.rel (0) target = $region9
    $region8: #{tpu_custom_call.1} parent=1 // pred_region
      %s28 = ssub.s32 256, 256
      %29 = vsyncadd [#allocation7], %s28
      %s30 = sshll.u32 [#allocation6], 4
      %s31 = int_to_ptr.vmem [resolvable:$true] %s30
      %36 = dma.hbm_to_vmem [thread:$0]  %s1, 256, %s31, [#allocation7], 64, 64, 4
    $region9: #{tpu_custom_call.1} parent=1 // pred_fallthru
      _
    // Predicated region
    $region10: #{tpu_custom_call.1} parent=1 // pred_check
      _
    $region11: #{tpu_custom_call.1} parent=1 // pred_check_branch
      %38 = sbr.rel (0) target = $region13
    $region12: #{tpu_custom_call.1} parent=1 // pred_region
      _
    $region13: #{tpu_custom_call.1} parent=1 // pred_fallthru
      _
    // Predicated region
    $region14: #{tpu_custom_call.1} parent=1 // pred_check
      _
    $region15: #{tpu_custom_call.1} parent=1 // pred_check_branch
      %40 = sbr.rel (0) target = $region17
    $region16: #{tpu_custom_call.1} parent=1 // pred_region
      %s42 = ssub.s32 512, 512
      %43 = vsyncadd [#allocation7], %s42
      %s44 = sshll.u32 [#allocation8], 4
      %s45 = int_to_ptr.vmem [resolvable:$true] %s44
      %50 = dma.hbm_to_vmem [thread:$0]  %s3, 512, %s45, [#allocation7], 64, 64, 4
    $region17: #{tpu_custom_call.1} parent=1 // pred_fallthru
      _
    // Predicated region
    $region18: #{tpu_custom_call.1} parent=1 // pred_check
      _
    $region19: #{tpu_custom_call.1} parent=1 // pred_check_branch
      %52 = sbr.rel (0) target = $region21
    $region20: #{tpu_custom_call.1} parent=1 // pred_region
      _
    $region21: #{tpu_custom_call.1} parent=1 // pred_fallthru
      _
    // Predicated region
    $region22: #{tpu_custom_call.1} parent=1 // pred_check
      _
    $region23: #{tpu_custom_call.1} parent=1 // pred_check_branch
      %54 = sbr.rel (0) target = $region25
    $region24: #{tpu_custom_call.1} parent=1 // pred_region
      %55 = dma.done [#allocation4], 128
    $region25: #{tpu_custom_call.1} parent=1 // pred_fallthru
      _
    // Predicated region
    $region26: #{tpu_custom_call.1} parent=1 // pred_check
      _
    $region27: #{tpu_custom_call.1} parent=1 // pred_check_branch
      %57 = sbr.rel (0) target = $region29
    $region28: #{tpu_custom_call.1} parent=1 // pred_region
      %58 = dma.done [#allocation7], 256
    $region29: #{tpu_custom_call.1} parent=1 // pred_fallthru
      _
    // Predicated region
    $region30: #{tpu_custom_call.1} parent=1 // pred_check
      _
    $region31: #{tpu_custom_call.1} parent=1 // pred_check_branch
      %60 = sbr.rel (0) target = $region33
    $region32: #{tpu_custom_call.1} parent=1 // pred_region
      %61 = dma.done [#allocation7], 512
    $region33: #{tpu_custom_call.1} parent=1 // pred_fallthru
      _
    %p63 = scmp.eq.s32.totalorder 0, 0
    // Predicated region
    $region34: #{tpu_custom_call.1} parent=1 // pred_check
      %p64 = pneg %p63
    $region35: #{tpu_custom_call.1} parent=1 // pred_check_branch
      %66 = sbr.rel (%p64) target = $region37
    $region36: #{tpu_custom_call.1} parent=1 // pred_region
      %vm67 = vcmask 523264
      %68 = vst.msk [vmem:[#allocation2] sm:$0xff] %vm67, 0.0
      %69 = vst.msk [vmem:[#allocation2 + $0x8] sm:$0xff] %vm67, 0.0
    $region37: #{tpu_custom_call.1} parent=1 // pred_fallthru
      _
    %v70 = vld [vmem:[#allocation3] sm:$0xf]
    %v71 = vld [vmem:[#allocation3 + $0x4] sm:$0xf]
    %v72 = vld [vmem:[#allocation6] sm:$0xf]
    %v73 = vld [vmem:[#allocation6 + $0x4] sm:$0xf]
    %v74 = vld [vmem:[#allocation6 + $0x8] sm:$0xf]
    %v75 = vld [vmem:[#allocation6 + $0xc] sm:$0xf]
    %v76 = vld [vmem:[%s2] sm:$0x1]
    %v78 = vlaneseq
    %v79 = vshrl.u32 %v78, 7
    %v80 = vsub.s32 0, %v79
    %v81 = vrot.slane %v76, %v80
    %v85 = vunpack.c.l.b16 %v70
    %v86 = vunpack.c.l.b16 %v71
    %v87 = vpack.c.b16 %v86, %v85
    %v92 = vunpack.c.l.b16 %v72
    %v93 = vunpack.c.l.b16 %v73
    %v94 = vunpack.c.l.b16 %v74
    %v95 = vunpack.c.l.b16 %v75
    %v96 = vpack.c.b16 %v93, %v92
    %v97 = vpack.c.b16 %v95, %v94
    %vm100 = vcmask 261120
    %v102 = vsel %vm100, %v87, 0
    %104 = vmatprep.subr.bf16.mxu0 0
    %105 = vmatpush1.bf16.msra.mxu0 %v96
    %106 = vmatprep.subr.bf16.mxu0 0
    %107 = vmatpush1.bf16.msra.mxu0 %v97
    %108 = vmatprep.subr.bf16.mxu0 0
    %109 = vmatpush1.bf16.msra.mxu0 0
    %110 = vmatprep.subr.bf16.mxu0 0
    %111 = vmatpush1.bf16.msra.mxu0 0
    %112 = vmatprep.subr.bf16.mxu0 0
    %113 = vmatpush1.bf16.msra.mxu0 0
    %114 = vmatprep.subr.bf16.mxu0 0
    %115 = vmatpush1.bf16.msra.mxu0 0
    %116 = vmatprep.subr.bf16.mxu0 0
    %117 = vmatpush1.bf16.msra.mxu0 0
    %118 = vmatprep.subr.bf16.mxu0 0
    %119 = vmatpush1.bf16.msra.mxu0 0
    %120 = vmatprep.subr.bf16.mxu0 0
    %121 = vmatpush1.bf16.msra.mxu0 0
    %122 = vmatprep.subr.bf16.mxu0 0
    %123 = vmatpush1.bf16.msra.mxu0 0
    %124 = vmatprep.subr.bf16.mxu0 0
    %125 = vmatpush1.bf16.msra.mxu0 0
    %126 = vmatprep.subr.bf16.mxu0 0
    %127 = vmatpush1.bf16.msra.mxu0 0
    %128 = vmatprep.subr.bf16.mxu0 0
    %129 = vmatpush1.bf16.msra.mxu0 0
    %130 = vmatprep.subr.bf16.mxu0 0
    %131 = vmatpush1.bf16.msra.mxu0 0
    %132 = vmatprep.subr.bf16.mxu0 0
    %133 = vmatpush1.bf16.msra.mxu0 0
    %134 = vmatprep.subr.bf16.mxu0 0
    %135 = vmatpush1.bf16.msra.mxu0 0
    %136 = vmatprep.mubr.bf16.mxu0 0
    %137 = vmatmul.mubr.bf16.gmra.mrb[0].mxu0 %v102
    %v138 = vpop.f32.mrb[0].mxu0
    %v139 = vadd.f32 %v81, %v138
    %v140 = vpop.f32.mrb[0].mxu0
    %v141 = vpop.f32.mrb[0].mxu0
    %v142 = vadd.f32 %v81, %v141
    %v143 = vpop.f32.mrb[0].mxu0
    %144 = vdwg.mxu0
    %v145 = vsub.f32 0.0, %v139
    %v146 = vsub.f32 0.0, %v142
    %v147 = vmul.f32 %v145, 1.442695
    %v148 = vpow.pop %v147
    %v149 = vmul.f32 %v146, 1.442695
    %v150 = vpow.pop %v149
    %v151 = vadd.f32 %v148, 1.0
    %v152 = vadd.f32 %v150, 1.0
    %v153 = vrcp.pop %v151
    %v154 = vrcp.pop %v152
    %v155 = vmul.f32 %v139, %v153
    %v156 = vmul.f32 %v142, %v154
    %v157 = vld [vmem:[#allocation2] sm:$0xff]
    %v158 = vld [vmem:[#allocation2 + $0x8] sm:$0xff]
    %v159 = vpack.c.bf16 %v156, %v155
    %v160 = vld [vmem:[#allocation8] sm:$0xf]
    %v161 = vld [vmem:[#allocation8 + $0x4] sm:$0xf]
    %v162 = vld [vmem:[#allocation8 + $0x8] sm:$0xf]
    %v163 = vld [vmem:[#allocation8 + $0xc] sm:$0xf]
    %v164 = vld [vmem:[#allocation8 + $0x10] sm:$0xf]
    %v165 = vld [vmem:[#allocation8 + $0x14] sm:$0xf]
    %v166 = vld [vmem:[#allocation8 + $0x18] sm:$0xf]
    %v167 = vld [vmem:[#allocation8 + $0x1c] sm:$0xf]
    %v176 = vunpack.c.l.b16 %v160
    %v177 = vunpack.c.l.b16 %v161
    %v178 = vunpack.c.l.b16 %v162
    %v179 = vunpack.c.l.b16 %v163
    %v180 = vunpack.c.l.b16 %v164
    %v181 = vunpack.c.l.b16 %v165
    %v182 = vunpack.c.l.b16 %v166
    %v183 = vunpack.c.l.b16 %v167
    %v184 = vpack.c.b16 %v177, %v176
    %v185 = vpack.c.b16 %v179, %v178
    %v186 = vpack.c.b16 %v181, %v180
    %v187 = vpack.c.b16 %v183, %v182
    %vm192 = vcmask 523264
    %v194 = vsel %vm192, %v159, 0
    %196 = vmatprep.subr.bf16.mxu0 0
    %197 = vmatpush1.bf16.msra.mxu0 %v184
    %198 = vmatprep.subr.bf16.mxu0 0
    %199 = vmatpush1.bf16.msra.mxu0 %v185
    %200 = vmatprep.subr.bf16.mxu0 0
    %201 = vmatpush1.bf16.msra.mxu0 %v186
    %202 = vmatprep.subr.bf16.mxu0 0
    %203 = vmatpush1.bf16.msra.mxu0 %v187
    %204 = vmatprep.subr.bf16.mxu0 0
    %205 = vmatpush1.bf16.msra.mxu0 0
    %206 = vmatprep.subr.bf16.mxu0 0
    %207 = vmatpush1.bf16.msra.mxu0 0
    %208 = vmatprep.subr.bf16.mxu0 0
    %209 = vmatpush1.bf16.msra.mxu0 0
    %210 = vmatprep.subr.bf16.mxu0 0
    %211 = vmatpush1.bf16.msra.mxu0 0
    %212 = vmatprep.subr.bf16.mxu0 0
    %213 = vmatpush1.bf16.msra.mxu0 0
    %214 = vmatprep.subr.bf16.mxu0 0
    %215 = vmatpush1.bf16.msra.mxu0 0
    %216 = vmatprep.subr.bf16.mxu0 0
    %217 = vmatpush1.bf16.msra.mxu0 0
    %218 = vmatprep.subr.bf16.mxu0 0
    %219 = vmatpush1.bf16.msra.mxu0 0
    %220 = vmatprep.subr.bf16.mxu0 0
    %221 = vmatpush1.bf16.msra.mxu0 0
    %222 = vmatprep.subr.bf16.mxu0 0
    %223 = vmatpush1.bf16.msra.mxu0 0
    %224 = vmatprep.subr.bf16.mxu0 0
    %225 = vmatpush1.bf16.msra.mxu0 0
    %226 = vmatprep.subr.bf16.mxu0 0
    %227 = vmatpush1.bf16.msra.mxu0 0
    %228 = vmatprep.mubr.bf16.mxu0 0
    %229 = vmatmul.mubr.bf16.gmra.mrb[0].mxu0 %v194
    %v230 = vpop.f32.mrb[0].mxu0
    %v231 = vadd.f32 0.0, %v230
    %v232 = vpop.f32.mrb[0].mxu0
    %v233 = vpop.f32.mrb[0].mxu0
    %v234 = vadd.f32 0.0, %v233
    %v235 = vpop.f32.mrb[0].mxu0
    %236 = vdwg.mxu0
    %v237 = vadd.f32 %v157, %v231
    %v238 = vadd.f32 %v158, %v234
    %239 = vst.msk [vmem:[#allocation2] sm:$0xff] %vm192, %v237
    %240 = vst.msk [vmem:[#allocation2 + $0x8] sm:$0xff] %vm192, %v238
    // Predicated region
    $region38: #{tpu_custom_call.1} parent=1 // pred_check
      %p241 = pneg %p63
    $region39: #{tpu_custom_call.1} parent=1 // pred_check_branch
      %243 = sbr.rel (%p241) target = $region41
    $region40: #{tpu_custom_call.1} parent=1 // pred_region
      %v244 = vld [vmem:[#allocation2] sm:$0xff]
      %v245 = vld [vmem:[#allocation2 + $0x8] sm:$0xff]
      %v246 = vld [vmem:[%s4] sm:$0x1]
      %v248 = vlaneseq
      %v249 = vshrl.u32 %v248, 7
      %v250 = vsub.s32 0, %v249
      %v251 = vrot.slane %v246, %v250
      %v253 = vadd.f32 %v244, %v251
      %v254 = vadd.f32 %v245, %v251
      %255 = vst.msk [vmem:[#allocation9] sm:$0xff] %vm192, %v253
      %256 = vst.msk [vmem:[#allocation9 + $0x8] sm:$0xff] %vm192, %v254
    $region41: #{tpu_custom_call.1} parent=1 // pred_fallthru
      _
    // Predicated region
    $region42: #{tpu_custom_call.1} parent=1 // pred_check
      _
    $region43: #{tpu_custom_call.1} parent=1 // pred_check_branch
      %258 = sbr.rel (0) target = $region45
    $region44: #{tpu_custom_call.1} parent=1 // pred_region
      %s260 = ssub.s32 256, 256
      %261 = vsyncadd [#allocation5], %s260
      %s262 = sshll.u32 [#allocation9], 4
      %s263 = int_to_ptr.vmem [resolvable:$true] %s262
      %268 = dma.vmem_to_hbm [thread:$0]  %s263, 256, %s5, [#allocation5], 128, 128, 8
    $region45: #{tpu_custom_call.1} parent=1 // pred_fallthru
      _
    // Predicated region
    $region46: #{tpu_custom_call.1} parent=1 // pred_check
      _
    $region47: #{tpu_custom_call.1} parent=1 // pred_check_branch
      %270 = sbr.rel (0) target = $region49
    $region48: #{tpu_custom_call.1} parent=1 // pred_region
      %271 = dma.done [#allocation5], 256
    $region49: #{tpu_custom_call.1} parent=1 // pred_fallthru
      _
    %272 = vsyncpa [#allocation4], 1
    %273 = vsyncpa [#allocation7], 1
    %274 = vsyncpa [#allocation5], 1

</llo_original>
